<compile_context>
chip_gen: v7x
topology: tpu7x:2x2x1
jax: 0.10.0
libtpu: 0.0.40
codegen_flags: <defaults>
</compile_context>

<pallas_src>
from functools import partial

import jax
import jax.numpy as jnp
from jax.experimental import pallas as pl
from jax.experimental.pallas import tpu as pltpu


def rnn_classify_kernel(tok_ref, embproj_ref, whh_ref, wcls_ref, bcls_ref, out_ref):
    """Whole forward pass in a single kernel invocation.

    tok_ref     : (1, T*BP) int32  token ids, time-major, batch padded to BP (lane-dense)
    embproj_ref : (V, H)    f32    fused table emb @ W_ih^T (row 0 == 0 -> padding_idx=0)
    whh_ref     : (H, H)    f32    W_hh^T
    wcls_ref    : (H, LP)   f32    classifier weight^T, zero-padded to LP (lane-dense) cols
    bcls_ref    : (1, LP)   f32    classifier bias, zero-padded
    out_ref     : (BP, LP)  f32    padded logits (wrapper slices back to (B, L))
    """
    TB = tok_ref.shape[1]
    V = embproj_ref.shape[0]
    H = whh_ref.shape[0]
    BP = out_ref.shape[0]
    T = TB // BP  # static at trace time

    # ---- fused embedding lookup + input projection (single MXU matmul) ----
    # One-hot is built transposed, (V, TB): the lane-dense (1, TB) token row only needs a
    # sublane-broadcast against the vocab iota.  Out-of-range token ids yield an all-zero
    # one-hot column (zero embedding) rather than an error, unlike torch nn.Embedding.
    tok = tok_ref[...]                                              # (1, TB) int32
    vocab_iota = jax.lax.broadcasted_iota(jnp.int32, (V, TB), 0)    # row index = vocab id
    onehot_t = (tok == vocab_iota).astype(jnp.float32)              # (V, TB)
    # xw_all[i, h] = sum_v onehot_t[v, i] * emb_proj[v, h]  (contract leading dim of both)
    xw_all = jax.lax.dot_general(
        onehot_t, embproj_ref[...],
        dimension_numbers=(((0,), (0,)), ((), ())),
        preferred_element_type=jnp.float32)                         # (TB, H)

    # ---- serial tanh recurrence (the only truly sequential part) ----
    whh = whh_ref[...]                                              # hoisted once
    h = jnp.zeros((BP, H), jnp.float32)
    for t in range(T):  # static unroll; T is small and known at trace time
        # xw_t first, matmul accumulated onto it (v7x MRB-friendly ordering).
        h = jnp.tanh(
            xw_all[t * BP:(t + 1) * BP, :]
            + jnp.dot(h, whh, preferred_element_type=jnp.float32))

    # ---- classifier on the last hidden state (lane-dense padded output) ----
    logits = jnp.dot(h, wcls_ref[...], preferred_element_type=jnp.float32) + bcls_ref[...]
    out_ref[...] = logits.astype(out_ref.dtype)


def prepare_params(params):
    """One-time parameter preparation (hoisted out of the per-call forward path)."""
    emb = params["embedding"]          # (V, D)
    w_ih = params["w_ih"]              # (H, D)   PyTorch layout
    w_hh = params["w_hh"]              # (H, H)
    w_cls = params["w_cls"]            # (L, H)
    b_cls = params["b_cls"]            # (L,)

    H = w_hh.shape[0]
    L = w_cls.shape[0]
    LP = ((L + 127) // 128) * 128      # lane-dense padded classifier width

    # Fused embedding + input projection.  padding_idx=0 semantics require row 0 == 0;
    # emb row 0 is zero for nn.Embedding(padding_idx=0), but enforce the invariant anyway.
    emb_proj = jnp.dot(emb, w_ih.T).at[0].set(0.0)                   # (V, H)
    whh_t = w_hh.T                                                   # (H, H)
    wcls_p = jnp.zeros((H, LP), jnp.float32).at[:, :L].set(w_cls.T)  # (H, LP)
    bcls_p = jnp.zeros((1, LP), jnp.float32).at[0, :L].set(b_cls)    # (1, LP)

    return {"emb_proj": emb_proj, "whh_t": whh_t, "wcls_p": wcls_p, "bcls_p": bcls_p}


@partial(jax.jit, static_argnames=("sentence_length",))
def rnn_model_forward(x_tokens, prepped, sentence_length):
    """Forward pass of RNNModel (y=None branch): returns logits (B, sentence_length)."""
    B, T = x_tokens.shape
    BP = ((B + 7) // 8) * 8            # pad batch to the f32 sublane count

    emb_proj = prepped["emb_proj"]
    whh_t = prepped["whh_t"]
    wcls_p = prepped["wcls_p"]
    bcls_p = prepped["bcls_p"]
    LP = wcls_p.shape[1]

    # Per-call glue on tiny tensors only: time-major, batch-padded, lane-dense token ids.
    # Padded batch rows use token id 0 (padding_idx) and are sliced away at the end.
    tok_tm = jnp.zeros((T, BP), jnp.int32).at[:, :B].set(x_tokens.astype(jnp.int32).T)
    tok_flat = tok_tm.reshape(1, T * BP)                             # row index = t*BP + b

    out_padded = pl.pallas_call(
        rnn_classify_kernel,
        out_shape=jax.ShapeDtypeStruct((BP, LP), jnp.float32),
        # No grid: every operand is a small, fully VMEM-resident block (<50 KiB total).
        in_specs=[pl.BlockSpec(memory_space=pltpu.MemorySpace.VMEM)] * 5,
        out_specs=pl.BlockSpec(memory_space=pltpu.MemorySpace.VMEM),
    )(tok_flat, emb_proj, whh_t, wcls_p, bcls_p)

    return out_padded[:B, :sentence_length]


def init_params(key, vocab_size, char_dim, hidden_size, sentence_length):
    k1, k2, k3, k4, k5 = jax.random.split(key, 5)
    emb = jax.random.normal(k1, (vocab_size, char_dim), jnp.float32) * 0.1
    emb = emb.at[0].set(0.0)  # padding_idx=0 -> zero row (matches nn.Embedding init)
    w_ih = jax.random.normal(k2, (hidden_size, char_dim), jnp.float32) * 0.1
    w_hh = jax.random.normal(k3, (hidden_size, hidden_size), jnp.float32) * 0.1
    w_cls = jax.random.normal(k4, (sentence_length, hidden_size), jnp.float32) * 0.1
    b_cls = jax.random.normal(k5, (sentence_length,), jnp.float32) * 0.1
    return {"embedding": emb, "w_ih": w_ih, "w_hh": w_hh, "w_cls": w_cls, "b_cls": b_cls}


def reference_forward(x_tokens, params):
    """Pure-JAX reference mirroring PyTorch semantics (for a sanity check)."""
    emb = jnp.take(params["embedding"], x_tokens, axis=0)        # (B, T, D)
    B, T, D = emb.shape
    H = params["w_hh"].shape[0]
    h = jnp.zeros((B, H), jnp.float32)
    for t in range(T):
        h = jnp.tanh(emb[:, t, :] @ params["w_ih"].T + h @ params["w_hh"].T)
    return h @ params["w_cls"].T + params["b_cls"]


if __name__ == "__main__":
    # Small shapes consistent with the module's forward:
    #   vocab=30, char_dim=32, hidden_size=32, sentence_length=8, batch=2
    VOCAB, CHAR_DIM, HIDDEN, SENT_LEN, BATCH = 30, 32, 32, 8, 2

    key = jax.random.PRNGKey(0)
    pkey, xkey = jax.random.split(key)
    params = init_params(pkey, VOCAB, CHAR_DIM, HIDDEN, SENT_LEN)
    prepped = prepare_params(params)   # one-time weight prep, hoisted out of the forward

    # Token ids in [0, vocab); sequence length == sentence_length (as in the original script).
    x_tokens = jax.random.randint(xkey, (BATCH, SENT_LEN), 0, VOCAB, dtype=jnp.int32)

    y_pred = rnn_model_forward(x_tokens, prepped, SENT_LEN)
    y_pred = jax.block_until_ready(y_pred)

    y_ref = reference_forward(x_tokens, params)
    assert y_pred.shape == (BATCH, SENT_LEN)
    assert jnp.allclose(y_pred, y_ref, atol=1e-4, rtol=1e-4), "mismatch vs reference"

    print("KERNEL_OK")
</pallas_src>

<mosaic_0001>
module attributes {stable_mosaic.version = 11 : i64} {
  func.func @rnn_classify_kernel(%arg0: memref<1x64xi32, #tpu.memory_space<vmem>>, %arg1: memref<30x32xf32, #tpu.memory_space<vmem>>, %arg2: memref<32x32xf32, #tpu.memory_space<vmem>>, %arg3: memref<32x128xf32, #tpu.memory_space<vmem>>, %arg4: memref<1x128xf32, #tpu.memory_space<vmem>>, %arg5: memref<8x128xf32, #tpu.memory_space<vmem>>) attributes {dimension_semantics = [], scalar_prefetch = 0 : i64, scratch_operands = 0 : i64, tpu.core_type = #tpu.core_type<tc>} {
    %c0 = arith.constant 0 : index
    %c0_0 = arith.constant 0 : index
    %0 = vector.load %arg0[%c0, %c0_0] : memref<1x64xi32, #tpu.memory_space<vmem>>, vector<1x64xi32>
    %1 = tpu.iota {dimensions = array<i32: 0>} : vector<30x64xi32>
    %2 = vector.broadcast %0 : vector<1x64xi32> to vector<30x64xi32>
    %3 = arith.cmpi eq, %2, %1 : vector<30x64xi32>
    %4 = arith.extui %3 : vector<30x64xi1> to vector<30x64xi32>
    %5 = arith.sitofp %4 : vector<30x64xi32> to vector<30x64xf32>
    %c0_1 = arith.constant 0 : index
    %c0_2 = arith.constant 0 : index
    %6 = vector.load %arg1[%c0_1, %c0_2] : memref<30x32xf32, #tpu.memory_space<vmem>>, vector<30x32xf32>
    %cst = arith.constant dense<0.000000e+00> : vector<64x32xf32>
    %7 = tpu.matmul %5, %6, %cst {dimension_numbers = #tpu.dot_dimension_numbers<[0], [0], [1], [1], [0, 1, 1, 1], [], []>} : vector<30x64xf32>, vector<30x32xf32>, vector<64x32xf32> -> vector<64x32xf32>
    %c0_3 = arith.constant 0 : index
    %c0_4 = arith.constant 0 : index
    %8 = vector.load %arg2[%c0_3, %c0_4] : memref<32x32xf32, #tpu.memory_space<vmem>>, vector<32x32xf32>
    %cst_5 = arith.constant 0.000000e+00 : f32
    %9 = vector.broadcast %cst_5 : f32 to vector<8x32xf32>
    %10 = vector.extract_strided_slice %7 {offsets = [0, 0], sizes = [8, 32], strides = [1, 1]} : vector<64x32xf32> to vector<8x32xf32>
    %cst_6 = arith.constant dense<0.000000e+00> : vector<8x32xf32>
    %11 = tpu.matmul %9, %8, %cst_6 {dimension_numbers = #tpu.dot_dimension_numbers<[1], [0], [0], [1], [0, 0, 1, 1], [], []>} : vector<8x32xf32>, vector<32x32xf32>, vector<8x32xf32> -> vector<8x32xf32>
    %12 = arith.addf %10, %11 : vector<8x32xf32>
    %13 = math.tanh %12 : vector<8x32xf32>
    %14 = vector.extract_strided_slice %7 {offsets = [8, 0], sizes = [8, 32], strides = [1, 1]} : vector<64x32xf32> to vector<8x32xf32>
    %cst_7 = arith.constant dense<0.000000e+00> : vector<8x32xf32>
    %15 = tpu.matmul %13, %8, %cst_7 {dimension_numbers = #tpu.dot_dimension_numbers<[1], [0], [0], [1], [0, 0, 1, 1], [], []>} : vector<8x32xf32>, vector<32x32xf32>, vector<8x32xf32> -> vector<8x32xf32>
    %16 = arith.addf %14, %15 : vector<8x32xf32>
    %17 = math.tanh %16 : vector<8x32xf32>
    %18 = vector.extract_strided_slice %7 {offsets = [16, 0], sizes = [8, 32], strides = [1, 1]} : vector<64x32xf32> to vector<8x32xf32>
    %cst_8 = arith.constant dense<0.000000e+00> : vector<8x32xf32>
    %19 = tpu.matmul %17, %8, %cst_8 {dimension_numbers = #tpu.dot_dimension_numbers<[1], [0], [0], [1], [0, 0, 1, 1], [], []>} : vector<8x32xf32>, vector<32x32xf32>, vector<8x32xf32> -> vector<8x32xf32>
    %20 = arith.addf %18, %19 : vector<8x32xf32>
    %21 = math.tanh %20 : vector<8x32xf32>
    %22 = vector.extract_strided_slice %7 {offsets = [24, 0], sizes = [8, 32], strides = [1, 1]} : vector<64x32xf32> to vector<8x32xf32>
    %cst_9 = arith.constant dense<0.000000e+00> : vector<8x32xf32>
    %23 = tpu.matmul %21, %8, %cst_9 {dimension_numbers = #tpu.dot_dimension_numbers<[1], [0], [0], [1], [0, 0, 1, 1], [], []>} : vector<8x32xf32>, vector<32x32xf32>, vector<8x32xf32> -> vector<8x32xf32>
    %24 = arith.addf %22, %23 : vector<8x32xf32>
    %25 = math.tanh %24 : vector<8x32xf32>
    %26 = vector.extract_strided_slice %7 {offsets = [32, 0], sizes = [8, 32], strides = [1, 1]} : vector<64x32xf32> to vector<8x32xf32>
    %cst_10 = arith.constant dense<0.000000e+00> : vector<8x32xf32>
    %27 = tpu.matmul %25, %8, %cst_10 {dimension_numbers = #tpu.dot_dimension_numbers<[1], [0], [0], [1], [0, 0, 1, 1], [], []>} : vector<8x32xf32>, vector<32x32xf32>, vector<8x32xf32> -> vector<8x32xf32>
    %28 = arith.addf %26, %27 : vector<8x32xf32>
    %29 = math.tanh %28 : vector<8x32xf32>
    %30 = vector.extract_strided_slice %7 {offsets = [40, 0], sizes = [8, 32], strides = [1, 1]} : vector<64x32xf32> to vector<8x32xf32>
    %cst_11 = arith.constant dense<0.000000e+00> : vector<8x32xf32>
    %31 = tpu.matmul %29, %8, %cst_11 {dimension_numbers = #tpu.dot_dimension_numbers<[1], [0], [0], [1], [0, 0, 1, 1], [], []>} : vector<8x32xf32>, vector<32x32xf32>, vector<8x32xf32> -> vector<8x32xf32>
    %32 = arith.addf %30, %31 : vector<8x32xf32>
    %33 = math.tanh %32 : vector<8x32xf32>
    %34 = vector.extract_strided_slice %7 {offsets = [48, 0], sizes = [8, 32], strides = [1, 1]} : vector<64x32xf32> to vector<8x32xf32>
    %cst_12 = arith.constant dense<0.000000e+00> : vector<8x32xf32>
    %35 = tpu.matmul %33, %8, %cst_12 {dimension_numbers = #tpu.dot_dimension_numbers<[1], [0], [0], [1], [0, 0, 1, 1], [], []>} : vector<8x32xf32>, vector<32x32xf32>, vector<8x32xf32> -> vector<8x32xf32>
    %36 = arith.addf %34, %35 : vector<8x32xf32>
    %37 = math.tanh %36 : vector<8x32xf32>
    %38 = vector.extract_strided_slice %7 {offsets = [56, 0], sizes = [8, 32], strides = [1, 1]} : vector<64x32xf32> to vector<8x32xf32>
    %cst_13 = arith.constant dense<0.000000e+00> : vector<8x32xf32>
    %39 = tpu.matmul %37, %8, %cst_13 {dimension_numbers = #tpu.dot_dimension_numbers<[1], [0], [0], [1], [0, 0, 1, 1], [], []>} : vector<8x32xf32>, vector<32x32xf32>, vector<8x32xf32> -> vector<8x32xf32>
    %40 = arith.addf %38, %39 : vector<8x32xf32>
    %41 = math.tanh %40 : vector<8x32xf32>
    %c0_14 = arith.constant 0 : index
    %c0_15 = arith.constant 0 : index
    %42 = vector.load %arg3[%c0_14, %c0_15] : memref<32x128xf32, #tpu.memory_space<vmem>>, vector<32x128xf32>
    %cst_16 = arith.constant dense<0.000000e+00> : vector<8x128xf32>
    %43 = tpu.matmul %41, %42, %cst_16 {dimension_numbers = #tpu.dot_dimension_numbers<[1], [0], [0], [1], [0, 0, 1, 1], [], []>} : vector<8x32xf32>, vector<32x128xf32>, vector<8x128xf32> -> vector<8x128xf32>
    %c0_17 = arith.constant 0 : index
    %c0_18 = arith.constant 0 : index
    %44 = vector.load %arg4[%c0_17, %c0_18] : memref<1x128xf32, #tpu.memory_space<vmem>>, vector<1x128xf32>
    %45 = vector.broadcast %44 : vector<1x128xf32> to vector<8x128xf32>
    %46 = arith.addf %43, %45 : vector<8x128xf32>
    %c0_19 = arith.constant 0 : index
    %c0_20 = arith.constant 0 : index
    %47 = vector.load %arg5[%c0_19, %c0_20] : memref<8x128xf32, #tpu.memory_space<vmem>>, vector<8x128xf32>
    tpu.vector_store %arg5[%c0_19, %c0_20], %46 {strides = array<i32>} : memref<8x128xf32, #tpu.memory_space<vmem>>, vector<8x128xf32>,
    return
  }
}

</mosaic_0001>

<llo_original>
// kernel: rnn_model_forward.1
$region0: #{rnn_model_forward.1}
  #allocation0 [shape = 'u32[]', space=smem, size = 0x4, offset = 0x4, fixed_abs, tag = 'smem constant byte address 0x4 - core index']
  #allocation1 [shape = 'u32[144,128]{1,0:T(1,128)}', space=vmem, size = 0x12000, scoped, tag = 'internal scratch']
  %s0 = inlined_call_operand.vmem [shape: s32[1,64], index: 0, kind: input, shape index: {}]
  %s1 = inlined_call_operand.vmem [shape: f32[30,32], index: 1, kind: input, shape index: {}]
  %s2 = inlined_call_operand.hbm [shape: f32[32,32], index: 2, kind: input, shape index: {}]
  %s3 = inlined_call_operand.hbm [shape: f32[32,128], index: 3, kind: input, shape index: {}]
  %s4 = inlined_call_operand.vmem [shape: f32[1,128], index: 4, kind: input, shape index: {}]
  %s5 = inlined_call_operand.vmem [shape: f32[8,128], index: 5, kind: output, shape index: {}]
  %s6 = sld [smem:[#allocation0]]
  $region38: #{rnn_model_forward.1} parent=0
    _
  %s8 = ssub.s32 1, %s6
  %s9 = scalar_select 0, %s8, %s6
  $region1: #{rnn_model_forward.1} parent=0
    #allocation2 [shape = 'u8[16384]{0}', space=vmem, size = 0x4000, scoped, tag = 'input window, operand 2, single buffered']
    #allocation3 [shape = 's32[1]{0}', space=sflag, size = 0x4, scoped, tag = 'scoped memory for rnn_model_forward.1']
    #allocation4 [shape = 'u8[16384]{0}', space=vmem, size = 0x4000, scoped, tag = 'input window, operand 3, single buffered']
    #allocation5 [shape = 's32[1]{0}', space=sflag, size = 0x4, scoped, tag = 'scoped memory for rnn_model_forward.1']
    %10 = vsyncpa [#allocation3], 0
    %11 = vsyncpa [#allocation5], 0
    // Predicated region
    $region2: #{rnn_model_forward.1} parent=1 // pred_check
      _
    $region3: #{rnn_model_forward.1} parent=1 // pred_check_branch
      %13 = sbr.rel (0) target = $region5
    $region4: #{rnn_model_forward.1} parent=1 // pred_region
      _
    $region5: #{rnn_model_forward.1} parent=1 // pred_fallthru
      _
    // Predicated region
    $region6: #{rnn_model_forward.1} parent=1 // pred_check
      _
    $region7: #{rnn_model_forward.1} parent=1 // pred_check_branch
      %15 = sbr.rel (0) target = $region9
    $region8: #{rnn_model_forward.1} parent=1 // pred_region
      _
    $region9: #{rnn_model_forward.1} parent=1 // pred_fallthru
      _
    // Predicated region
    $region10: #{rnn_model_forward.1} parent=1 // pred_check
      _
    $region11: #{rnn_model_forward.1} parent=1 // pred_check_branch
      %17 = sbr.rel (0) target = $region13
    $region12: #{rnn_model_forward.1} parent=1 // pred_region
      %s19 = ssub.s32 512, 512
      %20 = vsyncadd [#allocation3], %s19
      %s21 = sshll.u32 [#allocation2], 4
      %s22 = int_to_ptr.vmem [resolvable:$true] %s21
      %27 = dma.hbm_to_vmem [thread:$0]  %s2, 512, %s22, [#allocation3], 128, 128, 8
    $region13: #{rnn_model_forward.1} parent=1 // pred_fallthru
      _
    // Predicated region
    $region14: #{rnn_model_forward.1} parent=1 // pred_check
      _
    $region15: #{rnn_model_forward.1} parent=1 // pred_check_branch
      %29 = sbr.rel (0) target = $region17
    $region16: #{rnn_model_forward.1} parent=1 // pred_region
      %s31 = ssub.s32 512, 512
      %32 = vsyncadd [#allocation5], %s31
      %s33 = sshll.u32 [#allocation4], 4
      %s34 = int_to_ptr.vmem [resolvable:$true] %s33
      %39 = dma.hbm_to_vmem [thread:$0]  %s3, 512, %s34, [#allocation5], 128, 128, 8
    $region17: #{rnn_model_forward.1} parent=1 // pred_fallthru
      _
    // Predicated region
    $region18: #{rnn_model_forward.1} parent=1 // pred_check
      _
    $region19: #{rnn_model_forward.1} parent=1 // pred_check_branch
      %41 = sbr.rel (0) target = $region21
    $region20: #{rnn_model_forward.1} parent=1 // pred_region
      _
    $region21: #{rnn_model_forward.1} parent=1 // pred_fallthru
      _
    // Predicated region
    $region22: #{rnn_model_forward.1} parent=1 // pred_check
      _
    $region23: #{rnn_model_forward.1} parent=1 // pred_check_branch
      %43 = sbr.rel (0) target = $region25
    $region24: #{rnn_model_forward.1} parent=1 // pred_region
      %44 = dma.done [#allocation3], 512
    $region25: #{rnn_model_forward.1} parent=1 // pred_fallthru
      _
    // Predicated region
    $region26: #{rnn_model_forward.1} parent=1 // pred_check
      _
    $region27: #{rnn_model_forward.1} parent=1 // pred_check_branch
      %46 = sbr.rel (0) target = $region29
    $region28: #{rnn_model_forward.1} parent=1 // pred_region
      %47 = dma.done [#allocation5], 512
    $region29: #{rnn_model_forward.1} parent=1 // pred_fallthru
      _
    %v48 = vld [vmem:[%s0] sm:$0x1]
    %v49 = vlaneseq
    %v50 = vshrl.u32 %v49, 7
    %v51 = vadd.s32 %v50, 8
    %v52 = vadd.s32 %v50, 16
    %v53 = vadd.s32 %v50, 24
    %v54 = vlaneseq
    %v55 = vshrl.u32 %v54, 7
    %v56 = vsub.s32 0, %v55
    %v57 = vrot.slane %v48, %v56
    %vm58 = vcmp.eq.s32.totalorder %v57, %v50
    %vm59 = vcmp.eq.s32.totalorder %v57, %v51
    %vm60 = vcmp.eq.s32.totalorder %v57, %v52
    %vm61 = vcmp.eq.s32.totalorder %v57, %v53
    %v62 = vsel %vm58, 1, 0
    %v63 = vsel %vm59, 1, 0
    %v64 = vsel %vm60, 1, 0
    %v65 = vsel %vm61, 1, 0
    %v66 = vcvt.s32.f32 %v62
    %v67 = vcvt.s32.f32 %v63
    %v68 = vcvt.s32.f32 %v64
    %v69 = vcvt.s32.f32 %v65
    %v70 = vld [vmem:[%s1] sm:$0xff]
    %v71 = vld [vmem:[%s1 + $0x8] sm:$0xff]
    %v72 = vld [vmem:[%s1 + $0x10] sm:$0xff]
    %v73 = vld [vmem:[%s1 + $0x18] sm:$0x3f]
    %74 = vxpose.xlu0.b32.start [1/16] %v66, 128
    %75 = vxpose.xlu0.b32.cont [2/16] %v67, 128
    %76 = vxpose.xlu0.b32.cont [3/16] %v68, 128
    %77 = vxpose.xlu0.b32.cont [4/16] %v69, 128
    %78 = vxpose.xlu0.b32.cont [5/16] 0.0, 128
    %79 = vxpose.xlu0.b32.cont [6/16] 0.0, 128
    %80 = vxpose.xlu0.b32.cont [7/16] 0.0, 128
    %81 = vxpose.xlu0.b32.cont [8/16] 0.0, 128
    %82 = vxpose.xlu0.b32.cont [9/16] 0.0, 128
    %83 = vxpose.xlu0.b32.cont [10/16] 0.0, 128
    %84 = vxpose.xlu0.b32.cont [11/16] 0.0, 128
    %85 = vxpose.xlu0.b32.cont [12/16] 0.0, 128
    %86 = vxpose.xlu0.b32.cont [13/16] 0.0, 128
    %87 = vxpose.xlu0.b32.cont [14/16] 0.0, 128
    %88 = vxpose.xlu0.b32.cont [15/16] 0.0, 128
    %89 = vxpose.xlu0.b32.end [16/16] 0.0, 128
    %v90 = vpop.trf.xlu0
    %v91 = vpop.trf.xlu0
    %v92 = vpop.trf.xlu0
    %v93 = vpop.trf.xlu0
    %v94 = vpop.trf.xlu0
    %v95 = vpop.trf.xlu0
    %v96 = vpop.trf.xlu0
    %v97 = vpop.trf.xlu0
    %v98 = vpop.trf.xlu0
    %v99 = vpop.trf.xlu0
    %v100 = vpop.trf.xlu0
    %v101 = vpop.trf.xlu0
    %v102 = vpop.trf.xlu0
    %v103 = vpop.trf.xlu0
    %v104 = vpop.trf.xlu0
    %v105 = vpop.trf.xlu0
    %vm106 = vcmask 244736
    %v108 = vsel %vm106, %v90, 0
    %v111 = vsel %vm106, %v91, 0
    %v114 = vsel %vm106, %v92, 0
    %v117 = vsel %vm106, %v93, 0
    %v120 = vsel %vm106, %v94, 0
    %v123 = vsel %vm106, %v95, 0
    %v126 = vsel %vm106, %v96, 0
    %v129 = vsel %vm106, %v97, 0
    %vm131 = vcmask 1045504
    %v133 = vsel %vm131, %v73, 0
    %135 = vmatprep.subr.mxu0 0.0
    %136 = vmatpush1.msra.mxu0 %v70
    %137 = vmatprep.subr.mxu0 0.0
    %138 = vmatpush1.msra.mxu0 %v71
    %139 = vmatprep.subr.mxu0 0.0
    %140 = vmatpush1.msra.mxu0 %v72
    %141 = vmatprep.subr.mxu0 0.0
    %142 = vmatpush1.msra.mxu0 %v133
    %143 = vmatprep.subr.mxu0 0.0
    %144 = vmatpush1.msra.mxu0 0.0
    %145 = vmatprep.subr.mxu0 0.0
    %146 = vmatpush1.msra.mxu0 0.0
    %147 = vmatprep.subr.mxu0 0.0
    %148 = vmatpush1.msra.mxu0 0.0
    %149 = vmatprep.subr.mxu0 0.0
    %150 = vmatpush1.msra.mxu0 0.0
    %151 = vmatprep.subr.mxu0 0.0
    %152 = vmatpush1.msra.mxu0 0.0
    %153 = vmatprep.subr.mxu0 0.0
    %154 = vmatpush1.msra.mxu0 0.0
    %155 = vmatprep.subr.mxu0 0.0
    %156 = vmatpush1.msra.mxu0 0.0
    %157 = vmatprep.subr.mxu0 0.0
    %158 = vmatpush1.msra.mxu0 0.0
    %159 = vmatprep.subr.mxu0 0.0
    %160 = vmatpush1.msra.mxu0 0.0
    %161 = vmatprep.subr.mxu0 0.0
    %162 = vmatpush1.msra.mxu0 0.0
    %163 = vmatprep.subr.mxu0 0.0
    %164 = vmatpush1.msra.mxu0 0.0
    %165 = vmatprep.subr.mxu0 0.0
    %166 = vmatpush1.msra.mxu0 0.0
    %167 = vmatprep.subr.mxu0 0.0
    %168 = vmatpush1.msra.mxu0 0.0
    %169 = vmatprep.subr.mxu0 0.0
    %170 = vmatpush1.msra.mxu0 0.0
    %171 = vmatprep.subr.mxu0 0.0
    %172 = vmatpush1.msra.mxu0 0.0
    %173 = vmatprep.subr.mxu0 0.0
    %174 = vmatpush1.msra.mxu0 0.0
    %175 = vmatprep.subr.mxu0 0.0
    %176 = vmatpush1.msra.mxu0 0.0
    %177 = vmatprep.subr.mxu0 0.0
    %178 = vmatpush1.msra.mxu0 0.0
    %179 = vmatprep.subr.mxu0 0.0
    %180 = vmatpush1.msra.mxu0 0.0
    %181 = vmatprep.subr.mxu0 0.0
    %182 = vmatpush1.msra.mxu0 0.0
    %183 = vmatprep.subr.mxu0 0.0
    %184 = vmatpush1.msra.mxu0 0.0
    %185 = vmatprep.subr.mxu0 0.0
    %186 = vmatpush1.msra.mxu0 0.0
    %187 = vmatprep.subr.mxu0 0.0
    %188 = vmatpush1.msra.mxu0 0.0
    %189 = vmatprep.subr.mxu0 0.0
    %190 = vmatpush1.msra.mxu0 0.0
    %191 = vmatprep.subr.mxu0 0.0
    %192 = vmatpush1.msra.mxu0 0.0
    %193 = vmatprep.subr.mxu0 0.0
    %194 = vmatpush1.msra.mxu0 0.0
    %195 = vmatprep.subr.mxu0 0.0
    %196 = vmatpush1.msra.mxu0 0.0
    %197 = vmatprep.subr.mxu0 0.0
    %198 = vmatpush1.msra.mxu0 0.0
    %199 = vmatprep.mubr.f32.mxu0 0.0
    %200 = vmatmul.mubr.f32.gmra.mrb[0].mxu0 %v108
    %v201 = vpop.f32.mrb[0].mxu0
    %v202 = vadd.f32 0.0, %v201
    %v203 = vpop.f32.mrb[0].mxu0
    %204 = vmatprep.mubr.f32.mxu0 0.0
    %205 = vmatmul.mubr.f32.gmra.mrb[0].mxu0 %v111
    %v206 = vpop.f32.mrb[0].mxu0
    %v207 = vadd.f32 0.0, %v206
    %v208 = vpop.f32.mrb[0].mxu0
    %209 = vmatprep.mubr.f32.mxu0 0.0
    %210 = vmatmul.mubr.f32.gmra.mrb[0].mxu0 %v114
    %v211 = vpop.f32.mrb[0].mxu0
    %v212 = vadd.f32 0.0, %v211
    %v213 = vpop.f32.mrb[0].mxu0
    %214 = vmatprep.mubr.f32.mxu0 0.0
    %215 = vmatmul.mubr.f32.gmra.mrb[0].mxu0 %v117
    %v216 = vpop.f32.mrb[0].mxu0
    %v217 = vadd.f32 0.0, %v216
    %v218 = vpop.f32.mrb[0].mxu0
    %219 = vmatprep.mubr.f32.mxu0 0.0
    %220 = vmatmul.mubr.f32.gmra.mrb[0].mxu0 %v120
    %v221 = vpop.f32.mrb[0].mxu0
    %v222 = vadd.f32 0.0, %v221
    %v223 = vpop.f32.mrb[0].mxu0
    %224 = vmatprep.mubr.f32.mxu0 0.0
    %225 = vmatmul.mubr.f32.gmra.mrb[0].mxu0 %v123
    %v226 = vpop.f32.mrb[0].mxu0
    %v227 = vadd.f32 0.0, %v226
    %v228 = vpop.f32.mrb[0].mxu0
    %229 = vmatprep.mubr.f32.mxu0 0.0
    %230 = vmatmul.mubr.f32.gmra.mrb[0].mxu0 %v126
    %v231 = vpop.f32.mrb[0].mxu0
    %v232 = vadd.f32 0.0, %v231
    %v233 = vpop.f32.mrb[0].mxu0
    %234 = vmatprep.mubr.f32.mxu0 0.0
    %235 = vmatmul.mubr.f32.gmra.mrb[0].mxu0 %v129
    %v236 = vpop.f32.mrb[0].mxu0
    %v237 = vadd.f32 0.0, %v236
    %v238 = vpop.f32.mrb[0].mxu0
    %239 = vdwg.mxu0
    %v240 = vld [vmem:[#allocation2] sm:$0xff]
    %v241 = vld [vmem:[#allocation2 + $0x8] sm:$0xff]
    %v242 = vld [vmem:[#allocation2 + $0x10] sm:$0xff]
    %v243 = vld [vmem:[#allocation2 + $0x18] sm:$0xff]
    %vm244 = vcmask 261120
    %v246 = vsel %vm244, 0.0, 0
    %248 = vmatprep.subr.mxu0 0.0
    %249 = vmatpush1.msra.mxu0 %v240
    %250 = vmatprep.subr.mxu0 0.0
    %251 = vmatpush1.msra.mxu0 %v241
    %252 = vmatprep.subr.mxu0 0.0
    %253 = vmatpush1.msra.mxu0 %v242
    %254 = vmatprep.subr.mxu0 0.0
    %255 = vmatpush1.msra.mxu0 %v243
    %256 = vmatprep.subr.mxu0 0.0
    %257 = vmatpush1.msra.mxu0 0.0
    %258 = vmatprep.subr.mxu0 0.0
    %259 = vmatpush1.msra.mxu0 0.0
    %260 = vmatprep.subr.mxu0 0.0
    %261 = vmatpush1.msra.mxu0 0.0
    %262 = vmatprep.subr.mxu0 0.0
    %263 = vmatpush1.msra.mxu0 0.0
    %264 = vmatprep.subr.mxu0 0.0
    %265 = vmatpush1.msra.mxu0 0.0
    %266 = vmatprep.subr.mxu0 0.0
    %267 = vmatpush1.msra.mxu0 0.0
    %268 = vmatprep.subr.mxu0 0.0
    %269 = vmatpush1.msra.mxu0 0.0
    %270 = vmatprep.subr.mxu0 0.0
    %271 = vmatpush1.msra.mxu0 0.0
    %272 = vmatprep.subr.mxu0 0.0
    %273 = vmatpush1.msra.mxu0 0.0
    %274 = vmatprep.subr.mxu0 0.0
    %275 = vmatpush1.msra.mxu0 0.0
    %276 = vmatprep.subr.mxu0 0.0
    %277 = vmatpush1.msra.mxu0 0.0
    %278 = vmatprep.subr.mxu0 0.0
    %279 = vmatpush1.msra.mxu0 0.0
    %280 = vmatprep.subr.mxu0 0.0
    %281 = vmatpush1.msra.mxu0 0.0
    %282 = vmatprep.subr.mxu0 0.0
    %283 = vmatpush1.msra.mxu0 0.0
    %284 = vmatprep.subr.mxu0 0.0
    %285 = vmatpush1.msra.mxu0 0.0
    %286 = vmatprep.subr.mxu0 0.0
    %287 = vmatpush1.msra.mxu0 0.0
    %288 = vmatprep.subr.mxu0 0.0
    %289 = vmatpush1.msra.mxu0 0.0
    %290 = vmatprep.subr.mxu0 0.0
    %291 = vmatpush1.msra.mxu0 0.0
    %292 = vmatprep.subr.mxu0 0.0
    %293 = vmatpush1.msra.mxu0 0.0
    %294 = vmatprep.subr.mxu0 0.0
    %295 = vmatpush1.msra.mxu0 0.0
    %296 = vmatprep.subr.mxu0 0.0
    %297 = vmatpush1.msra.mxu0 0.0
    %298 = vmatprep.subr.mxu0 0.0
    %299 = vmatpush1.msra.mxu0 0.0
    %300 = vmatprep.subr.mxu0 0.0
    %301 = vmatpush1.msra.mxu0 0.0
    %302 = vmatprep.subr.mxu0 0.0
    %303 = vmatpush1.msra.mxu0 0.0
    %304 = vmatprep.subr.mxu0 0.0
    %305 = vmatpush1.msra.mxu0 0.0
    %306 = vmatprep.subr.mxu0 0.0
    %307 = vmatpush1.msra.mxu0 0.0
    %308 = vmatprep.subr.mxu0 0.0
    %309 = vmatpush1.msra.mxu0 0.0
    %310 = vmatprep.subr.mxu0 0.0
    %311 = vmatpush1.msra.mxu0 0.0
    %312 = vmatprep.mubr.f32.mxu0 0.0
    %313 = vmatmul.mubr.f32.gmra.mrb[0].mxu0 %v246
    %v314 = vpop.f32.mrb[0].mxu0
    %v315 = vadd.f32 0.0, %v314
    %v316 = vpop.f32.mrb[0].mxu0
    %317 = vdwg.mxu0
    %v318 = vadd.f32 %v202, %v315
    %v319 = vtanh.pop %v318
    %v321 = vsel %vm244, %v319, 0
    %323 = vmatprep.subr.mxu0 0.0
    %324 = vmatpush1.msra.mxu0 %v240
    %325 = vmatprep.subr.mxu0 0.0
    %326 = vmatpush1.msra.mxu0 %v241
    %327 = vmatprep.subr.mxu0 0.0
    %328 = vmatpush1.msra.mxu0 %v242
    %329 = vmatprep.subr.mxu0 0.0
    %330 = vmatpush1.msra.mxu0 %v243
    %331 = vmatprep.subr.mxu0 0.0
    %332 = vmatpush1.msra.mxu0 0.0
    %333 = vmatprep.subr.mxu0 0.0
    %334 = vmatpush1.msra.mxu0 0.0
    %335 = vmatprep.subr.mxu0 0.0
    %336 = vmatpush1.msra.mxu0 0.0
    %337 = vmatprep.subr.mxu0 0.0
    %338 = vmatpush1.msra.mxu0 0.0
    %339 = vmatprep.subr.mxu0 0.0
    %340 = vmatpush1.msra.mxu0 0.0
    %341 = vmatprep.subr.mxu0 0.0
    %342 = vmatpush1.msra.mxu0 0.0
    %343 = vmatprep.subr.mxu0 0.0
    %344 = vmatpush1.msra.mxu0 0.0
    %345 = vmatprep.subr.mxu0 0.0
    %346 = vmatpush1.msra.mxu0 0.0
    %347 = vmatprep.subr.mxu0 0.0
    %348 = vmatpush1.msra.mxu0 0.0
    %349 = vmatprep.subr.mxu0 0.0
    %350 = vmatpush1.msra.mxu0 0.0
    %351 = vmatprep.subr.mxu0 0.0
    %352 = vmatpush1.msra.mxu0 0.0
    %353 = vmatprep.subr.mxu0 0.0
    %354 = vmatpush1.msra.mxu0 0.0
    %355 = vmatprep.subr.mxu0 0.0
    %356 = vmatpush1.msra.mxu0 0.0
    %357 = vmatprep.subr.mxu0 0.0
    %358 = vmatpush1.msra.mxu0 0.0
    %359 = vmatprep.subr.mxu0 0.0
    %360 = vmatpush1.msra.mxu0 0.0
    %361 = vmatprep.subr.mxu0 0.0
    %362 = vmatpush1.msra.mxu0 0.0
    %363 = vmatprep.subr.mxu0 0.0
    %364 = vmatpush1.msra.mxu0 0.0
    %365 = vmatprep.subr.mxu0 0.0
    %366 = vmatpush1.msra.mxu0 0.0
    %367 = vmatprep.subr.mxu0 0.0
    %368 = vmatpush1.msra.mxu0 0.0
    %369 = vmatprep.subr.mxu0 0.0
    %370 = vmatpush1.msra.mxu0 0.0
    %371 = vmatprep.subr.mxu0 0.0
    %372 = vmatpush1.msra.mxu0 0.0
    %373 = vmatprep.subr.mxu0 0.0
    %374 = vmatpush1.msra.mxu0 0.0
    %375 = vmatprep.subr.mxu0 0.0
    %376 = vmatpush1.msra.mxu0 0.0
    %377 = vmatprep.subr.mxu0 0.0
    %378 = vmatpush1.msra.mxu0 0.0
    %379 = vmatprep.subr.mxu0 0.0
    %380 = vmatpush1.msra.mxu0 0.0
    %381 = vmatprep.subr.mxu0 0.0
    %382 = vmatpush1.msra.mxu0 0.0
    %383 = vmatprep.subr.mxu0 0.0
    %384 = vmatpush1.msra.mxu0 0.0
    %385 = vmatprep.subr.mxu0 0.0
    %386 = vmatpush1.msra.mxu0 0.0
    %387 = vmatprep.mubr.f32.mxu0 0.0
    %388 = vmatmul.mubr.f32.gmra.mrb[0].mxu0 %v321
    %v389 = vpop.f32.mrb[0].mxu0
    %v390 = vadd.f32 0.0, %v389
    %v391 = vpop.f32.mrb[0].mxu0
    %392 = vdwg.mxu0
    %v393 = vadd.f32 %v207, %v390
    %v394 = vtanh.pop %v393
    %v396 = vsel %vm244, %v394, 0
    %398 = vmatprep.subr.mxu0 0.0
    %399 = vmatpush1.msra.mxu0 %v240
    %400 = vmatprep.subr.mxu0 0.0
    %401 = vmatpush1.msra.mxu0 %v241
    %402 = vmatprep.subr.mxu0 0.0
    %403 = vmatpush1.msra.mxu0 %v242
    %404 = vmatprep.subr.mxu0 0.0
    %405 = vmatpush1.msra.mxu0 %v243
    %406 = vmatprep.subr.mxu0 0.0
    %407 = vmatpush1.msra.mxu0 0.0
    %408 = vmatprep.subr.mxu0 0.0
    %409 = vmatpush1.msra.mxu0 0.0
    %410 = vmatprep.subr.mxu0 0.0
    %411 = vmatpush1.msra.mxu0 0.0
    %412 = vmatprep.subr.mxu0 0.0
    %413 = vmatpush1.msra.mxu0 0.0
    %414 = vmatprep.subr.mxu0 0.0
    %415 = vmatpush1.msra.mxu0 0.0
    %416 = vmatprep.subr.mxu0 0.0
    %417 = vmatpush1.msra.mxu0 0.0
    %418 = vmatprep.subr.mxu0 0.0
    %419 = vmatpush1.msra.mxu0 0.0
    %420 = vmatprep.subr.mxu0 0.0
    %421 = vmatpush1.msra.mxu0 0.0
    %422 = vmatprep.subr.mxu0 0.0
    %423 = vmatpush1.msra.mxu0 0.0
    %424 = vmatprep.subr.mxu0 0.0
    %425 = vmatpush1.msra.mxu0 0.0
    %426 = vmatprep.subr.mxu0 0.0
    %427 = vmatpush1.msra.mxu0 0.0
    %428 = vmatprep.subr.mxu0 0.0
    %429 = vmatpush1.msra.mxu0 0.0
    %430 = vmatprep.subr.mxu0 0.0
    %431 = vmatpush1.msra.mxu0 0.0
    %432 = vmatprep.subr.mxu0 0.0
    %433 = vmatpush1.msra.mxu0 0.0
    %434 = vmatprep.subr.mxu0 0.0
    %435 = vmatpush1.msra.mxu0 0.0
    %436 = vmatprep.subr.mxu0 0.0
    %437 = vmatpush1.msra.mxu0 0.0
    %438 = vmatprep.subr.mxu0 0.0
    %439 = vmatpush1.msra.mxu0 0.0
    %440 = vmatprep.subr.mxu0 0.0
    %441 = vmatpush1.msra.mxu0 0.0
    %442 = vmatprep.subr.mxu0 0.0
    %443 = vmatpush1.msra.mxu0 0.0
    %444 = vmatprep.subr.mxu0 0.0
    %445 = vmatpush1.msra.mxu0 0.0
    %446 = vmatprep.subr.mxu0 0.0
    %447 = vmatpush1.msra.mxu0 0.0
    %448 = vmatprep.subr.mxu0 0.0
    %449 = vmatpush1.msra.mxu0 0.0
    %450 = vmatprep.subr.mxu0 0.0
    %451 = vmatpush1.msra.mxu0 0.0
    %452 = vmatprep.subr.mxu0 0.0
    %453 = vmatpush1.msra.mxu0 0.0
    %454 = vmatprep.subr.mxu0 0.0
    %455 = vmatpush1.msra.mxu0 0.0
    %456 = vmatprep.subr.mxu0 0.0
    %457 = vmatpush1.msra.mxu0 0.0
    %458 = vmatprep.subr.mxu0 0.0
    %459 = vmatpush1.msra.mxu0 0.0
    %460 = vmatprep.subr.mxu0 0.0
    %461 = vmatpush1.msra.mxu0 0.0
    %462 = vmatprep.mubr.f32.mxu0 0.0
    %463 = vmatmul.mubr.f32.gmra.mrb[0].mxu0 %v396
    %v464 = vpop.f32.mrb[0].mxu0
    %v465 = vadd.f32 0.0, %v464
    %v466 = vpop.f32.mrb[0].mxu0
    %467 = vdwg.mxu0
    %v468 = vadd.f32 %v212, %v465
    %v469 = vtanh.pop %v468
    %v471 = vsel %vm244, %v469, 0
    %473 = vmatprep.subr.mxu0 0.0
    %474 = vmatpush1.msra.mxu0 %v240
    %475 = vmatprep.subr.mxu0 0.0
    %476 = vmatpush1.msra.mxu0 %v241
    %477 = vmatprep.subr.mxu0 0.0
    %478 = vmatpush1.msra.mxu0 %v242
    %479 = vmatprep.subr.mxu0 0.0
    %480 = vmatpush1.msra.mxu0 %v243
    %481 = vmatprep.subr.mxu0 0.0
    %482 = vmatpush1.msra.mxu0 0.0
    %483 = vmatprep.subr.mxu0 0.0
    %484 = vmatpush1.msra.mxu0 0.0
    %485 = vmatprep.subr.mxu0 0.0
    %486 = vmatpush1.msra.mxu0 0.0
    %487 = vmatprep.subr.mxu0 0.0
    %488 = vmatpush1.msra.mxu0 0.0
    %489 = vmatprep.subr.mxu0 0.0
    %490 = vmatpush1.msra.mxu0 0.0
    %491 = vmatprep.subr.mxu0 0.0
    %492 = vmatpush1.msra.mxu0 0.0
    %493 = vmatprep.subr.mxu0 0.0
    %494 = vmatpush1.msra.mxu0 0.0
    %495 = vmatprep.subr.mxu0 0.0
    %496 = vmatpush1.msra.mxu0 0.0
    %497 = vmatprep.subr.mxu0 0.0
    %498 = vmatpush1.msra.mxu0 0.0
    %499 = vmatprep.subr.mxu0 0.0
    %500 = vmatpush1.msra.mxu0 0.0
    %501 = vmatprep.subr.mxu0 0.0
    %502 = vmatpush1.msra.mxu0 0.0
    %503 = vmatprep.subr.mxu0 0.0
    %504 = vmatpush1.msra.mxu0 0.0
    %505 = vmatprep.subr.mxu0 0.0
    %506 = vmatpush1.msra.mxu0 0.0
    %507 = vmatprep.subr.mxu0 0.0
    %508 = vmatpush1.msra.mxu0 0.0
    %509 = vmatprep.subr.mxu0 0.0
    %510 = vmatpush1.msra.mxu0 0.0
    %511 = vmatprep.subr.mxu0 0.0
    %512 = vmatpush1.msra.mxu0 0.0
    %513 = vmatprep.subr.mxu0 0.0
    %514 = vmatpush1.msra.mxu0 0.0
    %515 = vmatprep.subr.mxu0 0.0
    %516 = vmatpush1.msra.mxu0 0.0
    %517 = vmatprep.subr.mxu0 0.0
    %518 = vmatpush1.msra.mxu0 0.0
    %519 = vmatprep.subr.mxu0 0.0
    %520 = vmatpush1.msra.mxu0 0.0
    %521 = vmatprep.subr.mxu0 0.0
    %522 = vmatpush1.msra.mxu0 0.0
    %523 = vmatprep.subr.mxu0 0.0
    %524 = vmatpush1.msra.mxu0 0.0
    %525 = vmatprep.subr.mxu0 0.0
    %526 = vmatpush1.msra.mxu0 0.0
    %527 = vmatprep.subr.mxu0 0.0
    %528 = vmatpush1.msra.mxu0 0.0
    %529 = vmatprep.subr.mxu0 0.0
    %530 = vmatpush1.msra.mxu0 0.0
    %531 = vmatprep.subr.mxu0 0.0
    %532 = vmatpush1.msra.mxu0 0.0
    %533 = vmatprep.subr.mxu0 0.0
    %534 = vmatpush1.msra.mxu0 0.0
    %535 = vmatprep.subr.mxu0 0.0
    %536 = vmatpush1.msra.mxu0 0.0
    %537 = vmatprep.mubr.f32.mxu0 0.0
    %538 = vmatmul.mubr.f32.gmra.mrb[0].mxu0 %v471
    %v539 = vpop.f32.mrb[0].mxu0
    %v540 = vadd.f32 0.0, %v539
    %v541 = vpop.f32.mrb[0].mxu0
    %542 = vdwg.mxu0
    %v543 = vadd.f32 %v217, %v540
    %v544 = vtanh.pop %v543
    %v546 = vsel %vm244, %v544, 0
    %548 = vmatprep.subr.mxu0 0.0
    %549 = vmatpush1.msra.mxu0 %v240
    %550 = vmatprep.subr.mxu0 0.0
    %551 = vmatpush1.msra.mxu0 %v241
    %552 = vmatprep.subr.mxu0 0.0
    %553 = vmatpush1.msra.mxu0 %v242
    %554 = vmatprep.subr.mxu0 0.0
    %555 = vmatpush1.msra.mxu0 %v243
    %556 = vmatprep.subr.mxu0 0.0
    %557 = vmatpush1.msra.mxu0 0.0
    %558 = vmatprep.subr.mxu0 0.0
    %559 = vmatpush1.msra.mxu0 0.0
    %560 = vmatprep.subr.mxu0 0.0
    %561 = vmatpush1.msra.mxu0 0.0
    %562 = vmatprep.subr.mxu0 0.0
    %563 = vmatpush1.msra.mxu0 0.0
    %564 = vmatprep.subr.mxu0 0.0
    %565 = vmatpush1.msra.mxu0 0.0
    %566 = vmatprep.subr.mxu0 0.0
    %567 = vmatpush1.msra.mxu0 0.0
    %568 = vmatprep.subr.mxu0 0.0
    %569 = vmatpush1.msra.mxu0 0.0
    %570 = vmatprep.subr.mxu0 0.0
    %571 = vmatpush1.msra.mxu0 0.0
    %572 = vmatprep.subr.mxu0 0.0
    %573 = vmatpush1.msra.mxu0 0.0
    %574 = vmatprep.subr.mxu0 0.0
    %575 = vmatpush1.msra.mxu0 0.0
    %576 = vmatprep.subr.mxu0 0.0
    %577 = vmatpush1.msra.mxu0 0.0
    %578 = vmatprep.subr.mxu0 0.0
    %579 = vmatpush1.msra.mxu0 0.0
    %580 = vmatprep.subr.mxu0 0.0
    %581 = vmatpush1.msra.mxu0 0.0
    %582 = vmatprep.subr.mxu0 0.0
    %583 = vmatpush1.msra.mxu0 0.0
    %584 = vmatprep.subr.mxu0 0.0
    %585 = vmatpush1.msra.mxu0 0.0
    %586 = vmatprep.subr.mxu0 0.0
    %587 = vmatpush1.msra.mxu0 0.0
    %588 = vmatprep.subr.mxu0 0.0
    %589 = vmatpush1.msra.mxu0 0.0
    %590 = vmatprep.subr.mxu0 0.0
    %591 = vmatpush1.msra.mxu0 0.0
    %592 = vmatprep.subr.mxu0 0.0
    %593 = vmatpush1.msra.mxu0 0.0
    %594 = vmatprep.subr.mxu0 0.0
    %595 = vmatpush1.msra.mxu0 0.0
    %596 = vmatprep.subr.mxu0 0.0
    %597 = vmatpush1.msra.mxu0 0.0
    %598 = vmatprep.subr.mxu0 0.0
    %599 = vmatpush1.msra.mxu0 0.0
    %600 = vmatprep.subr.mxu0 0.0
    %601 = vmatpush1.msra.mxu0 0.0
    %602 = vmatprep.subr.mxu0 0.0
    %603 = vmatpush1.msra.mxu0 0.0
    %604 = vmatprep.subr.mxu0 0.0
    %605 = vmatpush1.msra.mxu0 0.0
    %606 = vmatprep.subr.mxu0 0.0
    %607 = vmatpush1.msra.mxu0 0.0
    %608 = vmatprep.subr.mxu0 0.0
    %609 = vmatpush1.msra.mxu0 0.0
    %610 = vmatprep.subr.mxu0 0.0
    %611 = vmatpush1.msra.mxu0 0.0
    %612 = vmatprep.mubr.f32.mxu0 0.0
    %613 = vmatmul.mubr.f32.gmra.mrb[0].mxu0 %v546
    %v614 = vpop.f32.mrb[0].mxu0
    %v615 = vadd.f32 0.0, %v614
    %v616 = vpop.f32.mrb[0].mxu0
    %617 = vdwg.mxu0
    %v618 = vadd.f32 %v222, %v615
    %v619 = vtanh.pop %v618
    %v621 = vsel %vm244, %v619, 0
    %623 = vmatprep.subr.mxu0 0.0
    %624 = vmatpush1.msra.mxu0 %v240
    %625 = vmatprep.subr.mxu0 0.0
    %626 = vmatpush1.msra.mxu0 %v241
    %627 = vmatprep.subr.mxu0 0.0
    %628 = vmatpush1.msra.mxu0 %v242
    %629 = vmatprep.subr.mxu0 0.0
    %630 = vmatpush1.msra.mxu0 %v243
    %631 = vmatprep.subr.mxu0 0.0
    %632 = vmatpush1.msra.mxu0 0.0
    %633 = vmatprep.subr.mxu0 0.0
    %634 = vmatpush1.msra.mxu0 0.0
    %635 = vmatprep.subr.mxu0 0.0
    %636 = vmatpush1.msra.mxu0 0.0
    %637 = vmatprep.subr.mxu0 0.0
    %638 = vmatpush1.msra.mxu0 0.0
    %639 = vmatprep.subr.mxu0 0.0
    %640 = vmatpush1.msra.mxu0 0.0
    %641 = vmatprep.subr.mxu0 0.0
    %642 = vmatpush1.msra.mxu0 0.0
    %643 = vmatprep.subr.mxu0 0.0
    %644 = vmatpush1.msra.mxu0 0.0
    %645 = vmatprep.subr.mxu0 0.0
    %646 = vmatpush1.msra.mxu0 0.0
    %647 = vmatprep.subr.mxu0 0.0
    %648 = vmatpush1.msra.mxu0 0.0
    %649 = vmatprep.subr.mxu0 0.0
    %650 = vmatpush1.msra.mxu0 0.0
    %651 = vmatprep.subr.mxu0 0.0
    %652 = vmatpush1.msra.mxu0 0.0
    %653 = vmatprep.subr.mxu0 0.0
    %654 = vmatpush1.msra.mxu0 0.0
    %655 = vmatprep.subr.mxu0 0.0
    %656 = vmatpush1.msra.mxu0 0.0
    %657 = vmatprep.subr.mxu0 0.0
    %658 = vmatpush1.msra.mxu0 0.0
    %659 = vmatprep.subr.mxu0 0.0
    %660 = vmatpush1.msra.mxu0 0.0
    %661 = vmatprep.subr.mxu0 0.0
    %662 = vmatpush1.msra.mxu0 0.0
    %663 = vmatprep.subr.mxu0 0.0
    %664 = vmatpush1.msra.mxu0 0.0
    %665 = vmatprep.subr.mxu0 0.0
    %666 = vmatpush1.msra.mxu0 0.0
    %667 = vmatprep.subr.mxu0 0.0
    %668 = vmatpush1.msra.mxu0 0.0
    %669 = vmatprep.subr.mxu0 0.0
    %670 = vmatpush1.msra.mxu0 0.0
    %671 = vmatprep.subr.mxu0 0.0
    %672 = vmatpush1.msra.mxu0 0.0
    %673 = vmatprep.subr.mxu0 0.0
    %674 = vmatpush1.msra.mxu0 0.0
    %675 = vmatprep.subr.mxu0 0.0
    %676 = vmatpush1.msra.mxu0 0.0
    %677 = vmatprep.subr.mxu0 0.0
    %678 = vmatpush1.msra.mxu0 0.0
    %679 = vmatprep.subr.mxu0 0.0
    %680 = vmatpush1.msra.mxu0 0.0
    %681 = vmatprep.subr.mxu0 0.0
    %682 = vmatpush1.msra.mxu0 0.0
    %683 = vmatprep.subr.mxu0 0.0
    %684 = vmatpush1.msra.mxu0 0.0
    %685 = vmatprep.subr.mxu0 0.0
    %686 = vmatpush1.msra.mxu0 0.0
    %687 = vmatprep.mubr.f32.mxu0 0.0
    %688 = vmatmul.mubr.f32.gmra.mrb[0].mxu0 %v621
    %v689 = vpop.f32.mrb[0].mxu0
    %v690 = vadd.f32 0.0, %v689
    %v691 = vpop.f32.mrb[0].mxu0
    %692 = vdwg.mxu0
    %v693 = vadd.f32 %v227, %v690
    %v694 = vtanh.pop %v693
    %v696 = vsel %vm244, %v694, 0
    %698 = vmatprep.subr.mxu0 0.0
    %699 = vmatpush1.msra.mxu0 %v240
    %700 = vmatprep.subr.mxu0 0.0
    %701 = vmatpush1.msra.mxu0 %v241
    %702 = vmatprep.subr.mxu0 0.0
    %703 = vmatpush1.msra.mxu0 %v242
    %704 = vmatprep.subr.mxu0 0.0
    %705 = vmatpush1.msra.mxu0 %v243
    %706 = vmatprep.subr.mxu0 0.0
    %707 = vmatpush1.msra.mxu0 0.0
    %708 = vmatprep.subr.mxu0 0.0
    %709 = vmatpush1.msra.mxu0 0.0
    %710 = vmatprep.subr.mxu0 0.0
    %711 = vmatpush1.msra.mxu0 0.0
    %712 = vmatprep.subr.mxu0 0.0
    %713 = vmatpush1.msra.mxu0 0.0
    %714 = vmatprep.subr.mxu0 0.0
    %715 = vmatpush1.msra.mxu0 0.0
    %716 = vmatprep.subr.mxu0 0.0
    %717 = vmatpush1.msra.mxu0 0.0
    %718 = vmatprep.subr.mxu0 0.0
    %719 = vmatpush1.msra.mxu0 0.0
    %720 = vmatprep.subr.mxu0 0.0
    %721 = vmatpush1.msra.mxu0 0.0
    %722 = vmatprep.subr.mxu0 0.0
    %723 = vmatpush1.msra.mxu0 0.0
    %724 = vmatprep.subr.mxu0 0.0
    %725 = vmatpush1.msra.mxu0 0.0
    %726 = vmatprep.subr.mxu0 0.0
    %727 = vmatpush1.msra.mxu0 0.0
    %728 = vmatprep.subr.mxu0 0.0
    %729 = vmatpush1.msra.mxu0 0.0
    %730 = vmatprep.subr.mxu0 0.0
    %731 = vmatpush1.msra.mxu0 0.0
    %732 = vmatprep.subr.mxu0 0.0
    %733 = vmatpush1.msra.mxu0 0.0
    %734 = vmatprep.subr.mxu0 0.0
    %735 = vmatpush1.msra.mxu0 0.0
    %736 = vmatprep.subr.mxu0 0.0
    %737 = vmatpush1.msra.mxu0 0.0
    %738 = vmatprep.subr.mxu0 0.0
    %739 = vmatpush1.msra.mxu0 0.0
    %740 = vmatprep.subr.mxu0 0.0
    %741 = vmatpush1.msra.mxu0 0.0
    %742 = vmatprep.subr.mxu0 0.0
    %743 = vmatpush1.msra.mxu0 0.0
    %744 = vmatprep.subr.mxu0 0.0
    %745 = vmatpush1.msra.mxu0 0.0
    %746 = vmatprep.subr.mxu0 0.0
    %747 = vmatpush1.msra.mxu0 0.0
    %748 = vmatprep.subr.mxu0 0.0
    %749 = vmatpush1.msra.mxu0 0.0
    %750 = vmatprep.subr.mxu0 0.0
    %751 = vmatpush1.msra.mxu0 0.0
    %752 = vmatprep.subr.mxu0 0.0
    %753 = vmatpush1.msra.mxu0 0.0
    %754 = vmatprep.subr.mxu0 0.0
    %755 = vmatpush1.msra.mxu0 0.0
    %756 = vmatprep.subr.mxu0 0.0
    %757 = vmatpush1.msra.mxu0 0.0
    %758 = vmatprep.subr.mxu0 0.0
    %759 = vmatpush1.msra.mxu0 0.0
    %760 = vmatprep.subr.mxu0 0.0
    %761 = vmatpush1.msra.mxu0 0.0
    %762 = vmatprep.mubr.f32.mxu0 0.0
    %763 = vmatmul.mubr.f32.gmra.mrb[0].mxu0 %v696
    %v764 = vpop.f32.mrb[0].mxu0
    %v765 = vadd.f32 0.0, %v764
    %v766 = vpop.f32.mrb[0].mxu0
    %767 = vdwg.mxu0
    %v768 = vadd.f32 %v232, %v765
    %v769 = vtanh.pop %v768
    %v771 = vsel %vm244, %v769, 0
    %773 = vmatprep.subr.mxu0 0.0
    %774 = vmatpush1.msra.mxu0 %v240
    %775 = vmatprep.subr.mxu0 0.0
    %776 = vmatpush1.msra.mxu0 %v241
    %777 = vmatprep.subr.mxu0 0.0
    %778 = vmatpush1.msra.mxu0 %v242
    %779 = vmatprep.subr.mxu0 0.0
    %780 = vmatpush1.msra.mxu0 %v243
    %781 = vmatprep.subr.mxu0 0.0
    %782 = vmatpush1.msra.mxu0 0.0
    %783 = vmatprep.subr.mxu0 0.0
    %784 = vmatpush1.msra.mxu0 0.0
    %785 = vmatprep.subr.mxu0 0.0
    %786 = vmatpush1.msra.mxu0 0.0
    %787 = vmatprep.subr.mxu0 0.0
    %788 = vmatpush1.msra.mxu0 0.0
    %789 = vmatprep.subr.mxu0 0.0
    %790 = vmatpush1.msra.mxu0 0.0
    %791 = vmatprep.subr.mxu0 0.0
    %792 = vmatpush1.msra.mxu0 0.0
    %793 = vmatprep.subr.mxu0 0.0
    %794 = vmatpush1.msra.mxu0 0.0
    %795 = vmatprep.subr.mxu0 0.0
    %796 = vmatpush1.msra.mxu0 0.0
    %797 = vmatprep.subr.mxu0 0.0
    %798 = vmatpush1.msra.mxu0 0.0
    %799 = vmatprep.subr.mxu0 0.0
    %800 = vmatpush1.msra.mxu0 0.0
    %801 = vmatprep.subr.mxu0 0.0
    %802 = vmatpush1.msra.mxu0 0.0
    %803 = vmatprep.subr.mxu0 0.0
    %804 = vmatpush1.msra.mxu0 0.0
    %805 = vmatprep.subr.mxu0 0.0
    %806 = vmatpush1.msra.mxu0 0.0
    %807 = vmatprep.subr.mxu0 0.0
    %808 = vmatpush1.msra.mxu0 0.0
    %809 = vmatprep.subr.mxu0 0.0
    %810 = vmatpush1.msra.mxu0 0.0
    %811 = vmatprep.subr.mxu0 0.0
    %812 = vmatpush1.msra.mxu0 0.0
    %813 = vmatprep.subr.mxu0 0.0
    %814 = vmatpush1.msra.mxu0 0.0
    %815 = vmatprep.subr.mxu0 0.0
    %816 = vmatpush1.msra.mxu0 0.0
    %817 = vmatprep.subr.mxu0 0.0
    %818 = vmatpush1.msra.mxu0 0.0
    %819 = vmatprep.subr.mxu0 0.0
    %820 = vmatpush1.msra.mxu0 0.0
    %821 = vmatprep.subr.mxu0 0.0
    %822 = vmatpush1.msra.mxu0 0.0
    %823 = vmatprep.subr.mxu0 0.0
    %824 = vmatpush1.msra.mxu0 0.0
    %825 = vmatprep.subr.mxu0 0.0
    %826 = vmatpush1.msra.mxu0 0.0
    %827 = vmatprep.subr.mxu0 0.0
    %828 = vmatpush1.msra.mxu0 0.0
    %829 = vmatprep.subr.mxu0 0.0
    %830 = vmatpush1.msra.mxu0 0.0
    %831 = vmatprep.subr.mxu0 0.0
    %832 = vmatpush1.msra.mxu0 0.0
    %833 = vmatprep.subr.mxu0 0.0
    %834 = vmatpush1.msra.mxu0 0.0
    %835 = vmatprep.subr.mxu0 0.0
    %836 = vmatpush1.msra.mxu0 0.0
    %837 = vmatprep.mubr.f32.mxu0 0.0
    %838 = vmatmul.mubr.f32.gmra.mrb[0].mxu0 %v771
    %v839 = vpop.f32.mrb[0].mxu0
    %v840 = vadd.f32 0.0, %v839
    %v841 = vpop.f32.mrb[0].mxu0
    %842 = vdwg.mxu0
    %v843 = vadd.f32 %v237, %v840
    %v844 = vtanh.pop %v843
    %v845 = vld [vmem:[#allocation4] sm:$0xff]
    %v846 = vld [vmem:[#allocation4 + $0x8] sm:$0xff]
    %v847 = vld [vmem:[#allocation4 + $0x10] sm:$0xff]
    %v848 = vld [vmem:[#allocation4 + $0x18] sm:$0xff]
    %v849 = vld [vmem:[%s4] sm:$0x1]
    %v851 = vlaneseq
    %v852 = vshrl.u32 %v851, 7
    %v853 = vsub.s32 0, %v852
    %v854 = vrot.slane %v849, %v853
    %v857 = vsel %vm244, %v844, 0
    %859 = vmatprep.subr.mxu0 0.0
    %860 = vmatpush1.msra.mxu0 %v845
    %861 = vmatprep.subr.mxu0 0.0
    %862 = vmatpush1.msra.mxu0 %v846
    %863 = vmatprep.subr.mxu0 0.0
    %864 = vmatpush1.msra.mxu0 %v847
    %865 = vmatprep.subr.mxu0 0.0
    %866 = vmatpush1.msra.mxu0 %v848
    %867 = vmatprep.subr.mxu0 0.0
    %868 = vmatpush1.msra.mxu0 0.0
    %869 = vmatprep.subr.mxu0 0.0
    %870 = vmatpush1.msra.mxu0 0.0
    %871 = vmatprep.subr.mxu0 0.0
    %872 = vmatpush1.msra.mxu0 0.0
    %873 = vmatprep.subr.mxu0 0.0
    %874 = vmatpush1.msra.mxu0 0.0
    %875 = vmatprep.subr.mxu0 0.0
    %876 = vmatpush1.msra.mxu0 0.0
    %877 = vmatprep.subr.mxu0 0.0
    %878 = vmatpush1.msra.mxu0 0.0
    %879 = vmatprep.subr.mxu0 0.0
    %880 = vmatpush1.msra.mxu0 0.0
    %881 = vmatprep.subr.mxu0 0.0
    %882 = vmatpush1.msra.mxu0 0.0
    %883 = vmatprep.subr.mxu0 0.0
    %884 = vmatpush1.msra.mxu0 0.0
    %885 = vmatprep.subr.mxu0 0.0
    %886 = vmatpush1.msra.mxu0 0.0
    %887 = vmatprep.subr.mxu0 0.0
    %888 = vmatpush1.msra.mxu0 0.0
    %889 = vmatprep.subr.mxu0 0.0
    %890 = vmatpush1.msra.mxu0 0.0
    %891 = vmatprep.subr.mxu0 0.0
    %892 = vmatpush1.msra.mxu0 0.0
    %893 = vmatprep.subr.mxu0 0.0
    %894 = vmatpush1.msra.mxu0 0.0
    %895 = vmatprep.subr.mxu0 0.0
    %896 = vmatpush1.msra.mxu0 0.0
    %897 = vmatprep.subr.mxu0 0.0
    %898 = vmatpush1.msra.mxu0 0.0
    %899 = vmatprep.subr.mxu0 0.0
    %900 = vmatpush1.msra.mxu0 0.0
    %901 = vmatprep.subr.mxu0 0.0
    %902 = vmatpush1.msra.mxu0 0.0
    %903 = vmatprep.subr.mxu0 0.0
    %904 = vmatpush1.msra.mxu0 0.0
    %905 = vmatprep.subr.mxu0 0.0
    %906 = vmatpush1.msra.mxu0 0.0
    %907 = vmatprep.subr.mxu0 0.0
    %908 = vmatpush1.msra.mxu0 0.0
    %909 = vmatprep.subr.mxu0 0.0
    %910 = vmatpush1.msra.mxu0 0.0
    %911 = vmatprep.subr.mxu0 0.0
    %912 = vmatpush1.msra.mxu0 0.0
    %913 = vmatprep.subr.mxu0 0.0
    %914 = vmatpush1.msra.mxu0 0.0
    %915 = vmatprep.subr.mxu0 0.0
    %916 = vmatpush1.msra.mxu0 0.0
    %917 = vmatprep.subr.mxu0 0.0
    %918 = vmatpush1.msra.mxu0 0.0
    %919 = vmatprep.subr.mxu0 0.0
    %920 = vmatpush1.msra.mxu0 0.0
    %921 = vmatprep.subr.mxu0 0.0
    %922 = vmatpush1.msra.mxu0 0.0
    %923 = vmatprep.mubr.f32.mxu0 0.0
    %924 = vmatmul.mubr.f32.gmra.mrb[0].mxu0 %v857
    %v925 = vpop.f32.mrb[0].mxu0
    %v926 = vadd.f32 %v854, %v925
    %v927 = vpop.f32.mrb[0].mxu0
    %928 = vdwg.mxu0
    %929 = vst [vmem:[%s5] sm:$0xff] %v926
    // Predicated region
    $region30: #{rnn_model_forward.1} parent=1 // pred_check
      _
    $region31: #{rnn_model_forward.1} parent=1 // pred_check_branch
      %931 = sbr.rel (0) target = $region33
    $region32: #{rnn_model_forward.1} parent=1 // pred_region
      _
    $region33: #{rnn_model_forward.1} parent=1 // pred_fallthru
      _
    // Predicated region
    $region34: #{rnn_model_forward.1} parent=1 // pred_check
      _
    $region35: #{rnn_model_forward.1} parent=1 // pred_check_branch
      %933 = sbr.rel (0) target = $region37
    $region36: #{rnn_model_forward.1} parent=1 // pred_region
      _
    $region37: #{rnn_model_forward.1} parent=1 // pred_fallthru
      _
    %934 = vsyncpa [#allocation3], 1
    %935 = vsyncpa [#allocation5], 1

</llo_original>
